<compile_context>
chip_gen: v7x
topology: tpu7x:2x2x1
jax: 0.10.0
libtpu: 0.0.40
codegen_flags: <defaults>
</compile_context>

<pallas_src>
import jax
import jax.numpy as jnp
from jax.experimental import pallas as pl
from jax.experimental.pallas import tpu as pltpu


def _generator_mlp_kernel(y_ref, z_ref,
                          w1z_ref, w1y_ref, b1_ref,
                          w2_ref, b2_ref,
                          w3_ref, b3_ref,
                          w4_ref, b4_ref,
                          out_ref):
    tb = z_ref.shape[0]
    num_classes = w1y_ref.shape[0]

    # ---- fused glue: build the one-hot label block in-kernel -------------
    labels = y_ref[...]                                         # (TB, 1) int32
    cls_ids = jax.lax.broadcasted_iota(jnp.int32, (tb, num_classes), 1)
    onehot = (cls_ids == labels).astype(w1y_ref.dtype)          # (TB, C) bf16

    # ---- Layer 1: [z | onehot] @ W1 + b1 -> ReLU --------------------------
    # concat([z, onehot]) @ W1  ==  z @ W1[:latent] + onehot @ W1[latent:]
    h = jnp.dot(z_ref[...], w1z_ref[...], preferred_element_type=jnp.float32)
    h += jnp.dot(onehot, w1y_ref[...], preferred_element_type=jnp.float32)
    h = jnp.maximum(h + b1_ref[...], 0.0).astype(jnp.bfloat16)

    # ---- Layer 2: (TB, 128) @ (128, 256) + b2 -> ReLU ---------------------
    h = jnp.dot(h, w2_ref[...], preferred_element_type=jnp.float32)
    h = jnp.maximum(h + b2_ref[...], 0.0).astype(jnp.bfloat16)

    # ---- Layer 3: (TB, 256) @ (256, 512) + b3 -> ReLU ---------------------
    h = jnp.dot(h, w3_ref[...], preferred_element_type=jnp.float32)
    h = jnp.maximum(h + b3_ref[...], 0.0).astype(jnp.bfloat16)

    # ---- Layer 4: (TB, 512) @ (512, N_pad) + b4 -> Sigmoid ----------------
    h = jnp.dot(h, w4_ref[...], preferred_element_type=jnp.float32)
    h = h + b4_ref[...]
    # sigmoid(x) = 1 / (1 + exp(-x)); exp -> EUP, approx reciprocal -> EUP.
    sig = pl.reciprocal(1.0 + jnp.exp(-h), approx=True)
    out_ref[...] = sig.astype(out_ref.dtype)                    # full 128-lane stores


def init_generator_params(key, latent_dim, img_shape, num_classes):
    """Synthetic init matching nn.Linear shapes (uniform ±1/sqrt(fan_in)).
    Weights are stored in bf16 (MXU-native); biases in f32.
    w1 is split into its z-rows and one-hot rows; w4/b4 are zero-padded so the
    output last dim is a multiple of 128 (lane-dense stores)."""
    c, h, w = img_shape
    n_out = c * h * w
    n_pad = ((n_out + 127) // 128) * 128
    dims = [latent_dim + num_classes, 128, 256, 512, n_out]

    keys = jax.random.split(key, 8)

    def linear(kw, kb, fan_in, fan_out):
        bound = fan_in ** -0.5
        wgt = jax.random.uniform(kw, (fan_in, fan_out), jnp.float32, -bound, bound)
        bias = jax.random.uniform(kb, (1, fan_out), jnp.float32, -bound, bound)
        return wgt, bias

    params = {}
    w1, b1 = linear(keys[0], keys[1], dims[0], dims[1])
    params["w1_z"] = w1[:latent_dim].astype(jnp.bfloat16)   # (latent_dim, 128)
    params["w1_y"] = w1[latent_dim:].astype(jnp.bfloat16)   # (num_classes, 128)
    params["b1"] = b1

    w2, b2 = linear(keys[2], keys[3], dims[1], dims[2])
    params["w2"] = w2.astype(jnp.bfloat16)
    params["b2"] = b2

    w3, b3 = linear(keys[4], keys[5], dims[2], dims[3])
    params["w3"] = w3.astype(jnp.bfloat16)
    params["b3"] = b3

    w4, b4 = linear(keys[6], keys[7], dims[3], dims[4])
    params["w4"] = jnp.pad(w4, ((0, 0), (0, n_pad - n_out))).astype(jnp.bfloat16)
    params["b4"] = jnp.pad(b4, ((0, 0), (0, n_pad - n_out)))
    return params


def generator_forward(z, y, params, img_shape, num_classes):
    """z: (B, latent_dim) f32, y: (B,) int labels -> (B, C, H, W) f32."""
    c, h, w = img_shape
    n_out = c * h * w
    n_pad = params["w4"].shape[1]
    b, latent_dim = z.shape

    # Batch tiling: big enough tiles to keep the MXU fed, weights stay resident.
    tb = 256 if b >= 256 else b
    b_pad = pl.cdiv(b, tb) * tb
    if b_pad != b:
        z = jnp.pad(z, ((0, b_pad - b), (0, 0)))
        y = jnp.pad(y, ((0, b_pad - b),))

    z_bf16 = z.astype(jnp.bfloat16)
    y2d = y.astype(jnp.int32).reshape(b_pad, 1)

    grid = (b_pad // tb,)

    in_specs = [
        pl.BlockSpec((tb, 1), lambda i: (i, 0)),                       # labels
        pl.BlockSpec((tb, latent_dim), lambda i: (i, 0)),              # z tile
        pl.BlockSpec(params["w1_z"].shape, lambda i: (0, 0)),          # weights:
        pl.BlockSpec(params["w1_y"].shape, lambda i: (0, 0)),          #   pinned to
        pl.BlockSpec(params["b1"].shape, lambda i: (0, 0)),            #   block (0,0)
        pl.BlockSpec(params["w2"].shape, lambda i: (0, 0)),            #   -> stay
        pl.BlockSpec(params["b2"].shape, lambda i: (0, 0)),            #   VMEM-resident
        pl.BlockSpec(params["w3"].shape, lambda i: (0, 0)),
        pl.BlockSpec(params["b3"].shape, lambda i: (0, 0)),
        pl.BlockSpec(params["w4"].shape, lambda i: (0, 0)),
        pl.BlockSpec(params["b4"].shape, lambda i: (0, 0)),
    ]
    out_specs = pl.BlockSpec((tb, n_pad), lambda i: (i, 0))

    out_flat = pl.pallas_call(
        _generator_mlp_kernel,
        out_shape=jax.ShapeDtypeStruct((b_pad, n_pad), jnp.float32),
        grid=grid,
        in_specs=in_specs,
        out_specs=out_specs,
        compiler_params=pltpu.CompilerParams(
            dimension_semantics=("parallel",)),   # shards batch across TCs on v7x
    )(
        y2d, z_bf16,
        params["w1_z"], params["w1_y"], params["b1"],
        params["w2"], params["b2"],
        params["w3"], params["b3"],
        params["w4"], params["b4"],
    )
    # Drop batch / lane padding, then nn.Unflatten(1, img_shape) -> NCHW.
    return out_flat[:b, :n_out].reshape(b, c, h, w)


if __name__ == "__main__":
    latent_dim = 16
    num_classes = 10
    img_shape = (1, 8, 8)   # (C, H, W)
    batch = 8

    key = jax.random.PRNGKey(0)
    k_params, k_z, k_y = jax.random.split(key, 3)

    params = init_generator_params(k_params, latent_dim, img_shape, num_classes)
    z = jax.random.normal(k_z, (batch, latent_dim), dtype=jnp.float32)
    y = jax.random.randint(k_y, (batch,), 0, num_classes, dtype=jnp.int32)

    fwd = jax.jit(lambda z_, y_, p_: generator_forward(
        z_, y_, p_, img_shape, num_classes))

    x_hat = fwd(z, y, params)
    x_hat = jax.block_until_ready(x_hat)

    # Reference check in plain JAX (f32 math on the same bf16-stored weights).
    n_out = img_shape[0] * img_shape[1] * img_shape[2]
    w1_full = jnp.concatenate(
        [params["w1_z"], params["w1_y"]], axis=0).astype(jnp.float32)
    y_oh = jax.nn.one_hot(y, num_classes, dtype=jnp.float32)
    xin = jnp.concatenate([z, y_oh], axis=1)
    ref = jnp.maximum(xin @ w1_full + params["b1"], 0.0)
    ref = jnp.maximum(ref @ params["w2"].astype(jnp.float32) + params["b2"], 0.0)
    ref = jnp.maximum(ref @ params["w3"].astype(jnp.float32) + params["b3"], 0.0)
    ref = jax.nn.sigmoid(ref @ params["w4"].astype(jnp.float32) + params["b4"])
    ref = ref[:, :n_out].reshape(batch, *img_shape)

    assert x_hat.shape == (batch, *img_shape), x_hat.shape
    assert jnp.allclose(x_hat, ref, atol=2e-2, rtol=2e-2), float(
        jnp.max(jnp.abs(x_hat - ref)))
    print("KERNEL_OK")
</pallas_src>

<mosaic_0001>
module attributes {stable_mosaic.version = 11 : i64} {
  func.func @_generator_mlp_kernel(%arg0: i32, %arg1: memref<8x1xi32, #tpu.memory_space<vmem>>, %arg2: memref<8x16xbf16, #tpu.memory_space<vmem>>, %arg3: memref<16x128xbf16, #tpu.memory_space<vmem>>, %arg4: memref<10x128xbf16, #tpu.memory_space<vmem>>, %arg5: memref<1x128xf32, #tpu.memory_space<vmem>>, %arg6: memref<128x256xbf16, #tpu.memory_space<vmem>>, %arg7: memref<1x256xf32, #tpu.memory_space<vmem>>, %arg8: memref<256x512xbf16, #tpu.memory_space<vmem>>, %arg9: memref<1x512xf32, #tpu.memory_space<vmem>>, %arg10: memref<512x128xbf16, #tpu.memory_space<vmem>>, %arg11: memref<1x128xf32, #tpu.memory_space<vmem>>, %arg12: memref<8x128xf32, #tpu.memory_space<vmem>>) attributes {dimension_semantics = [#tpu.dimension_semantics<parallel>], iteration_bounds = array<i64: 1>, scalar_prefetch = 0 : i64, scratch_operands = 0 : i64, tpu.core_type = #tpu.core_type<tc>, window_params = [{transform_indices = @transform_0, window_bounds = array<i64: 8, 1>}, {transform_indices = @transform_1, window_bounds = array<i64: 8, 16>}, {pipeline_mode = #tpu.pipeline_mode<synchronous>, transform_indices = @transform_2, window_bounds = array<i64: 16, 128>}, {pipeline_mode = #tpu.pipeline_mode<synchronous>, transform_indices = @transform_3, window_bounds = array<i64: 10, 128>}, {pipeline_mode = #tpu.pipeline_mode<synchronous>, transform_indices = @transform_4, window_bounds = array<i64: 1, 128>}, {pipeline_mode = #tpu.pipeline_mode<synchronous>, transform_indices = @transform_5, window_bounds = array<i64: 128, 256>}, {pipeline_mode = #tpu.pipeline_mode<synchronous>, transform_indices = @transform_6, window_bounds = array<i64: 1, 256>}, {pipeline_mode = #tpu.pipeline_mode<synchronous>, transform_indices = @transform_7, window_bounds = array<i64: 256, 512>}, {pipeline_mode = #tpu.pipeline_mode<synchronous>, transform_indices = @transform_8, window_bounds = array<i64: 1, 512>}, {pipeline_mode = #tpu.pipeline_mode<synchronous>, transform_indices = @transform_9, window_bounds = array<i64: 512, 128>}, {pipeline_mode = #tpu.pipeline_mode<synchronous>, transform_indices = @transform_10, window_bounds = array<i64: 1, 128>}, {transform_indices = @transform_11, window_bounds = array<i64: 8, 128>}]} {
    %c0 = arith.constant 0 : index
    %c0_0 = arith.constant 0 : index
    %0 = vector.load %arg1[%c0, %c0_0] : memref<8x1xi32, #tpu.memory_space<vmem>>, vector<8x1xi32>
    %1 = tpu.iota {dimensions = array<i32: 1>} : vector<8x10xi32>
    %2 = vector.broadcast %0 : vector<8x1xi32> to vector<8x10xi32>
    %3 = arith.cmpi eq, %1, %2 : vector<8x10xi32>
    %4 = arith.extui %3 : vector<8x10xi1> to vector<8x10xi32>
    %5 = arith.sitofp %4 : vector<8x10xi32> to vector<8x10xf32>
    %6 = arith.truncf %5 : vector<8x10xf32> to vector<8x10xbf16>
    %c0_1 = arith.constant 0 : index
    %c0_2 = arith.constant 0 : index
    %7 = vector.load %arg2[%c0_1, %c0_2] : memref<8x16xbf16, #tpu.memory_space<vmem>>, vector<8x16xbf16>
    %c0_3 = arith.constant 0 : index
    %c0_4 = arith.constant 0 : index
    %8 = vector.load %arg3[%c0_3, %c0_4] : memref<16x128xbf16, #tpu.memory_space<vmem>>, vector<16x128xbf16>
    %cst = arith.constant dense<0.000000e+00> : vector<8x128xf32>
    %9 = tpu.matmul %7, %8, %cst {dimension_numbers = #tpu.dot_dimension_numbers<[1], [0], [0], [1], [0, 0, 1, 1], [], []>} : vector<8x16xbf16>, vector<16x128xbf16>, vector<8x128xf32> -> vector<8x128xf32>
    %c0_5 = arith.constant 0 : index
    %c0_6 = arith.constant 0 : index
    %10 = vector.load %arg4[%c0_5, %c0_6] : memref<10x128xbf16, #tpu.memory_space<vmem>>, vector<10x128xbf16>
    %cst_7 = arith.constant dense<0.000000e+00> : vector<8x128xf32>
    %11 = tpu.matmul %6, %10, %cst_7 {dimension_numbers = #tpu.dot_dimension_numbers<[1], [0], [0], [1], [0, 0, 1, 1], [], []>} : vector<8x10xbf16>, vector<10x128xbf16>, vector<8x128xf32> -> vector<8x128xf32>
    %12 = arith.addf %9, %11 : vector<8x128xf32>
    %c0_8 = arith.constant 0 : index
    %c0_9 = arith.constant 0 : index
    %13 = vector.load %arg5[%c0_8, %c0_9] : memref<1x128xf32, #tpu.memory_space<vmem>>, vector<1x128xf32>
    %14 = vector.broadcast %13 : vector<1x128xf32> to vector<8x128xf32>
    %15 = arith.addf %12, %14 : vector<8x128xf32>
    %cst_10 = arith.constant 0.000000e+00 : f32
    %16 = vector.broadcast %cst_10 : f32 to vector<8x128xf32>
    %17 = arith.maximumf %15, %16 : vector<8x128xf32>
    %18 = arith.truncf %17 : vector<8x128xf32> to vector<8x128xbf16>
    %c0_11 = arith.constant 0 : index
    %c0_12 = arith.constant 0 : index
    %19 = vector.load %arg6[%c0_11, %c0_12] : memref<128x256xbf16, #tpu.memory_space<vmem>>, vector<128x256xbf16>
    %cst_13 = arith.constant dense<0.000000e+00> : vector<8x256xf32>
    %20 = tpu.matmul %18, %19, %cst_13 {dimension_numbers = #tpu.dot_dimension_numbers<[1], [0], [0], [1], [0, 0, 1, 1], [], []>} : vector<8x128xbf16>, vector<128x256xbf16>, vector<8x256xf32> -> vector<8x256xf32>
    %c0_14 = arith.constant 0 : index
    %c0_15 = arith.constant 0 : index
    %21 = vector.load %arg7[%c0_14, %c0_15] : memref<1x256xf32, #tpu.memory_space<vmem>>, vector<1x256xf32>
    %22 = vector.broadcast %21 : vector<1x256xf32> to vector<8x256xf32>
    %23 = arith.addf %20, %22 : vector<8x256xf32>
    %cst_16 = arith.constant 0.000000e+00 : f32
    %24 = vector.broadcast %cst_16 : f32 to vector<8x256xf32>
    %25 = arith.maximumf %23, %24 : vector<8x256xf32>
    %26 = arith.truncf %25 : vector<8x256xf32> to vector<8x256xbf16>
    %c0_17 = arith.constant 0 : index
    %c0_18 = arith.constant 0 : index
    %27 = vector.load %arg8[%c0_17, %c0_18] : memref<256x512xbf16, #tpu.memory_space<vmem>>, vector<256x512xbf16>
    %cst_19 = arith.constant dense<0.000000e+00> : vector<8x512xf32>
    %28 = tpu.matmul %26, %27, %cst_19 {dimension_numbers = #tpu.dot_dimension_numbers<[1], [0], [0], [1], [0, 0, 1, 1], [], []>} : vector<8x256xbf16>, vector<256x512xbf16>, vector<8x512xf32> -> vector<8x512xf32>
    %c0_20 = arith.constant 0 : index
    %c0_21 = arith.constant 0 : index
    %29 = vector.load %arg9[%c0_20, %c0_21] : memref<1x512xf32, #tpu.memory_space<vmem>>, vector<1x512xf32>
    %30 = vector.broadcast %29 : vector<1x512xf32> to vector<8x512xf32>
    %31 = arith.addf %28, %30 : vector<8x512xf32>
    %cst_22 = arith.constant 0.000000e+00 : f32
    %32 = vector.broadcast %cst_22 : f32 to vector<8x512xf32>
    %33 = arith.maximumf %31, %32 : vector<8x512xf32>
    %34 = arith.truncf %33 : vector<8x512xf32> to vector<8x512xbf16>
    %c0_23 = arith.constant 0 : index
    %c0_24 = arith.constant 0 : index
    %35 = vector.load %arg10[%c0_23, %c0_24] : memref<512x128xbf16, #tpu.memory_space<vmem>>, vector<512x128xbf16>
    %cst_25 = arith.constant dense<0.000000e+00> : vector<8x128xf32>
    %36 = tpu.matmul %34, %35, %cst_25 {dimension_numbers = #tpu.dot_dimension_numbers<[1], [0], [0], [1], [0, 0, 1, 1], [], []>} : vector<8x512xbf16>, vector<512x128xbf16>, vector<8x128xf32> -> vector<8x128xf32>
    %c0_26 = arith.constant 0 : index
    %c0_27 = arith.constant 0 : index
    %37 = vector.load %arg11[%c0_26, %c0_27] : memref<1x128xf32, #tpu.memory_space<vmem>>, vector<1x128xf32>
    %38 = vector.broadcast %37 : vector<1x128xf32> to vector<8x128xf32>
    %39 = arith.addf %36, %38 : vector<8x128xf32>
    %cst_28 = arith.constant 0.000000e+00 : f32
    %40 = vector.broadcast %cst_28 : f32 to vector<8x128xf32>
    %41 = arith.subf %40, %39 : vector<8x128xf32>
    %42 = math.exp %41 : vector<8x128xf32>
    %cst_29 = arith.constant 1.000000e+00 : f32
    %43 = vector.broadcast %cst_29 : f32 to vector<8x128xf32>
    %44 = arith.addf %43, %42 : vector<8x128xf32>
    %45 = tpu.reciprocal %44 {approx = true} : vector<8x128xf32> -> vector<8x128xf32>
    %c0_30 = arith.constant 0 : index
    %c0_31 = arith.constant 0 : index
    %46 = vector.load %arg12[%c0_30, %c0_31] : memref<8x128xf32, #tpu.memory_space<vmem>>, vector<8x128xf32>
    tpu.vector_store %arg12[%c0_30, %c0_31], %45 {strides = array<i32>} : memref<8x128xf32, #tpu.memory_space<vmem>>, vector<8x128xf32>,
    return
  }
  func.func @transform_0(%arg0: i32) -> (i32, i32) {
    %c0_i32 = arith.constant 0 : i32
    %c0_i32_0 = arith.constant 0 : i32
    return %arg0, %c0_i32 : i32, i32
  }
  func.func @transform_1(%arg0: i32) -> (i32, i32) {
    %c0_i32 = arith.constant 0 : i32
    %c0_i32_0 = arith.constant 0 : i32
    return %arg0, %c0_i32 : i32, i32
  }
  func.func @transform_2(%arg0: i32) -> (i32, i32) {
    %c0_i32 = arith.constant 0 : i32
    %c0_i32_0 = arith.constant 0 : i32
    %c0_i32_1 = arith.constant 0 : i32
    return %c0_i32, %c0_i32_0 : i32, i32
  }
  func.func @transform_3(%arg0: i32) -> (i32, i32) {
    %c0_i32 = arith.constant 0 : i32
    %c0_i32_0 = arith.constant 0 : i32
    %c0_i32_1 = arith.constant 0 : i32
    return %c0_i32, %c0_i32_0 : i32, i32
  }
  func.func @transform_4(%arg0: i32) -> (i32, i32) {
    %c0_i32 = arith.constant 0 : i32
    %c0_i32_0 = arith.constant 0 : i32
    %c0_i32_1 = arith.constant 0 : i32
    return %c0_i32, %c0_i32_0 : i32, i32
  }
  func.func @transform_5(%arg0: i32) -> (i32, i32) {
    %c0_i32 = arith.constant 0 : i32
    %c0_i32_0 = arith.constant 0 : i32
    %c0_i32_1 = arith.constant 0 : i32
    return %c0_i32, %c0_i32_0 : i32, i32
  }
  func.func @transform_6(%arg0: i32) -> (i32, i32) {
    %c0_i32 = arith.constant 0 : i32
    %c0_i32_0 = arith.constant 0 : i32
    %c0_i32_1 = arith.constant 0 : i32
    return %c0_i32, %c0_i32_0 : i32, i32
  }
  func.func @transform_7(%arg0: i32) -> (i32, i32) {
    %c0_i32 = arith.constant 0 : i32
    %c0_i32_0 = arith.constant 0 : i32
    %c0_i32_1 = arith.constant 0 : i32
    return %c0_i32, %c0_i32_0 : i32, i32
  }
  func.func @transform_8(%arg0: i32) -> (i32, i32) {
    %c0_i32 = arith.constant 0 : i32
    %c0_i32_0 = arith.constant 0 : i32
    %c0_i32_1 = arith.constant 0 : i32
    return %c0_i32, %c0_i32_0 : i32, i32
  }
  func.func @transform_9(%arg0: i32) -> (i32, i32) {
    %c0_i32 = arith.constant 0 : i32
    %c0_i32_0 = arith.constant 0 : i32
    %c0_i32_1 = arith.constant 0 : i32
    return %c0_i32, %c0_i32_0 : i32, i32
  }
  func.func @transform_10(%arg0: i32) -> (i32, i32) {
    %c0_i32 = arith.constant 0 : i32
    %c0_i32_0 = arith.constant 0 : i32
    %c0_i32_1 = arith.constant 0 : i32
    return %c0_i32, %c0_i32_0 : i32, i32
  }
  func.func @transform_11(%arg0: i32) -> (i32, i32) {
    %c0_i32 = arith.constant 0 : i32
    %c0_i32_0 = arith.constant 0 : i32
    return %arg0, %c0_i32 : i32, i32
  }
}

</mosaic_0001>

<llo_original>
// kernel: _lambda_.1
$region0: #{_lambda_.1}
  #allocation0 [shape = 'u32[]', space=smem, size = 0x4, offset = 0x4, fixed_abs, tag = 'smem constant byte address 0x4 - core index']
  #allocation1 [shape = 'u32[144,128]{1,0:T(1,128)}', space=vmem, size = 0x12000, scoped, tag = 'internal scratch']
  %s0 = inlined_call_operand.vmem [shape: s32[8,1], index: 0, kind: input, shape index: {}]
  %s1 = inlined_call_operand.vmem [shape: bf16[8,16], index: 1, kind: input, shape index: {}]
  %s2 = inlined_call_operand.vmem [shape: bf16[16,128], index: 2, kind: input, shape index: {}]
  %s3 = inlined_call_operand.vmem [shape: bf16[10,128], index: 3, kind: input, shape index: {}]
  %s4 = inlined_call_operand.vmem [shape: f32[1,128], index: 4, kind: input, shape index: {}]
  %s5 = inlined_call_operand.hbm [shape: bf16[128,256], index: 5, kind: input, shape index: {}]
  %s6 = inlined_call_operand.vmem [shape: f32[1,256], index: 6, kind: input, shape index: {}]
  %s7 = inlined_call_operand.hbm [shape: bf16[256,512], index: 7, kind: input, shape index: {}]
  %s8 = inlined_call_operand.vmem [shape: f32[1,512], index: 8, kind: input, shape index: {}]
  %s9 = inlined_call_operand.hbm [shape: bf16[512,128], index: 9, kind: input, shape index: {}]
  %s10 = inlined_call_operand.vmem [shape: f32[1,128], index: 10, kind: input, shape index: {}]
  %s11 = inlined_call_operand.vmem [shape: f32[8,128], index: 11, kind: output, shape index: {}]
  %s12 = sld [smem:[#allocation0]]
  $region66: #{_lambda_.1} parent=0
    _
  %s14 = ssub.s32 1, %s12
  %s15 = scalar_select 0, %s14, %s12
  $region1: #{_lambda_.1} parent=0
    #allocation2 [shape = 'u8[65536]{0}', space=vmem, size = 0x10000, scoped, tag = 'input window, operand 5, single buffered']
    #allocation3 [shape = 's32[1]{0}', space=sflag, size = 0x4, scoped, tag = 'scoped memory for _lambda_.1']
    #allocation4 [shape = 'u8[262144]{0}', space=vmem, size = 0x40000, scoped, tag = 'input window, operand 7, single buffered']
    #allocation5 [shape = 's32[1]{0}', space=sflag, size = 0x4, scoped, tag = 'scoped memory for _lambda_.1']
    #allocation6 [shape = 'u8[131072]{0}', space=vmem, size = 0x20000, scoped, tag = 'input window, operand 9, single buffered']
    %16 = vsyncpa [#allocation3], 0
    %17 = vsyncpa [#allocation5], 0
    // Predicated region
    $region2: #{_lambda_.1} parent=1 // pred_check
      _
    $region3: #{_lambda_.1} parent=1 // pred_check_branch
      %19 = sbr.rel (0) target = $region5
    $region4: #{_lambda_.1} parent=1 // pred_region
      _
    $region5: #{_lambda_.1} parent=1 // pred_fallthru
      _
    // Predicated region
    $region6: #{_lambda_.1} parent=1 // pred_check
      _
    $region7: #{_lambda_.1} parent=1 // pred_check_branch
      %21 = sbr.rel (0) target = $region9
    $region8: #{_lambda_.1} parent=1 // pred_region
      _
    $region9: #{_lambda_.1} parent=1 // pred_fallthru
      _
    // Predicated region
    $region10: #{_lambda_.1} parent=1 // pred_check
      _
    $region11: #{_lambda_.1} parent=1 // pred_check_branch
      %23 = sbr.rel (0) target = $region13
    $region12: #{_lambda_.1} parent=1 // pred_region
      _
    $region13: #{_lambda_.1} parent=1 // pred_fallthru
      _
    // Predicated region
    $region14: #{_lambda_.1} parent=1 // pred_check
      _
    $region15: #{_lambda_.1} parent=1 // pred_check_branch
      %25 = sbr.rel (0) target = $region17
    $region16: #{_lambda_.1} parent=1 // pred_region
      _
    $region17: #{_lambda_.1} parent=1 // pred_fallthru
      _
    // Predicated region
    $region18: #{_lambda_.1} parent=1 // pred_check
      _
    $region19: #{_lambda_.1} parent=1 // pred_check_branch
      %27 = sbr.rel (0) target = $region21
    $region20: #{_lambda_.1} parent=1 // pred_region
      _
    $region21: #{_lambda_.1} parent=1 // pred_fallthru
      _
    // Predicated region
    $region22: #{_lambda_.1} parent=1 // pred_check
      _
    $region23: #{_lambda_.1} parent=1 // pred_check_branch
      %29 = sbr.rel (0) target = $region25
    $region24: #{_lambda_.1} parent=1 // pred_region
      %s31 = ssub.s32 2048, 2048
      %32 = vsyncadd [#allocation3], %s31
      %s33 = sshll.u32 [#allocation2], 4
      %s34 = int_to_ptr.vmem [resolvable:$true] %s33
      %39 = dma.hbm_to_vmem [thread:$0]  %s5, 2048, %s34, [#allocation3], 128, 128, 8
    $region25: #{_lambda_.1} parent=1 // pred_fallthru
      _
    // Predicated region
    $region26: #{_lambda_.1} parent=1 // pred_check
      _
    $region27: #{_lambda_.1} parent=1 // pred_check_branch
      %41 = sbr.rel (0) target = $region29
    $region28: #{_lambda_.1} parent=1 // pred_region
      _
    $region29: #{_lambda_.1} parent=1 // pred_fallthru
      _
    // Predicated region
    $region30: #{_lambda_.1} parent=1 // pred_check
      _
    $region31: #{_lambda_.1} parent=1 // pred_check_branch
      %43 = sbr.rel (0) target = $region33
    $region32: #{_lambda_.1} parent=1 // pred_region
      %s45 = ssub.s32 8192, 8192
      %46 = vsyncadd [#allocation5], %s45
      %s47 = sshll.u32 [#allocation4], 4
      %s48 = int_to_ptr.vmem [resolvable:$true] %s47
      %53 = dma.hbm_to_vmem [thread:$0]  %s7, 8192, %s48, [#allocation5], 256, 256, 16
    $region33: #{_lambda_.1} parent=1 // pred_fallthru
      _
    // Predicated region
    $region34: #{_lambda_.1} parent=1 // pred_check
      _
    $region35: #{_lambda_.1} parent=1 // pred_check_branch
      %55 = sbr.rel (0) target = $region37
    $region36: #{_lambda_.1} parent=1 // pred_region
      _
    $region37: #{_lambda_.1} parent=1 // pred_fallthru
      _
    // Predicated region
    $region38: #{_lambda_.1} parent=1 // pred_check
      _
    $region39: #{_lambda_.1} parent=1 // pred_check_branch
      %57 = sbr.rel (0) target = $region41
    $region40: #{_lambda_.1} parent=1 // pred_region
      %s59 = ssub.s32 4096, 4096
      %60 = vsyncadd [#allocation5], %s59
      %s61 = sshll.u32 [#allocation6], 4
      %s62 = int_to_ptr.vmem [resolvable:$true] %s61
      %67 = dma.hbm_to_vmem [thread:$0]  %s9, 4096, %s62, [#allocation5], 64, 64, 4
    $region41: #{_lambda_.1} parent=1 // pred_fallthru
      _
    // Predicated region
    $region42: #{_lambda_.1} parent=1 // pred_check
      _
    $region43: #{_lambda_.1} parent=1 // pred_check_branch
      %69 = sbr.rel (0) target = $region45
    $region44: #{_lambda_.1} parent=1 // pred_region
      _
    $region45: #{_lambda_.1} parent=1 // pred_fallthru
      _
    // Predicated region
    $region46: #{_lambda_.1} parent=1 // pred_check
      _
    $region47: #{_lambda_.1} parent=1 // pred_check_branch
      %71 = sbr.rel (0) target = $region49
    $region48: #{_lambda_.1} parent=1 // pred_region
      %72 = dma.done [#allocation3], 2048
    $region49: #{_lambda_.1} parent=1 // pred_fallthru
      _
    // Predicated region
    $region50: #{_lambda_.1} parent=1 // pred_check
      _
    $region51: #{_lambda_.1} parent=1 // pred_check_branch
      %74 = sbr.rel (0) target = $region53
    $region52: #{_lambda_.1} parent=1 // pred_region
      %75 = dma.done [#allocation5], 8192
    $region53: #{_lambda_.1} parent=1 // pred_fallthru
      _
    // Predicated region
    $region54: #{_lambda_.1} parent=1 // pred_check
      _
    $region55: #{_lambda_.1} parent=1 // pred_check_branch
      %77 = sbr.rel (0) target = $region57
    $region56: #{_lambda_.1} parent=1 // pred_region
      %78 = dma.done [#allocation5], 4096
    $region57: #{_lambda_.1} parent=1 // pred_fallthru
      _
    %v80 = vld [vmem:[%s0] sm:$0xff]
    %v81 = vlaneseq
    %v82 = vand.u32 %v81, 127
    %83 = vset.pattern.permute.xlu0 0
    %84 = vperm.xlu0 %83, %v80
    %v85 = vpop.permute.xlu0 %84
    %vm86 = vcmp.eq.s32.totalorder %v82, %v85
    %v87 = vsel %vm86, 1, 0
    %v88 = vcvt.s32.f32 %v87
    %v89 = vpack.c.bf16 %v88, %v88
    %v90 = vld [vmem:[%s1] sm:$0xf]
    %v91 = vld [vmem:[%s2] sm:$0xf]
    %v92 = vld [vmem:[%s2 + $0x4] sm:$0xf]
    %v93 = vld [vmem:[%s3] sm:$0xf]
    %v94 = vld [vmem:[%s3 + $0x4] sm:$0x1]
    %v97 = vunpack.c.l.b16 %v93
    %v98 = vunpack.c.l.b16 %v94
    %v99 = vpack.c.b16 %v98, %v97
    %vm100 = vcmask 80896
    %v102 = vsel %vm100, %v89, 0
    %vm104 = vcmask 1044480
    %v106 = vsel %vm104, %v99, 0
    %108 = vmatprep.subr.bf16.mxu0 0
    %109 = vmatpush1.bf16.msra.mxu0 %v106
    %110 = vmatprep.subr.bf16.mxu0 0
    %111 = vmatpush1.bf16.msra.mxu0 0
    %112 = vmatprep.subr.bf16.mxu0 0
    %113 = vmatpush1.bf16.msra.mxu0 0
    %114 = vmatprep.subr.bf16.mxu0 0
    %115 = vmatpush1.bf16.msra.mxu0 0
    %116 = vmatprep.subr.bf16.mxu0 0
    %117 = vmatpush1.bf16.msra.mxu0 0
    %118 = vmatprep.subr.bf16.mxu0 0
    %119 = vmatpush1.bf16.msra.mxu0 0
    %120 = vmatprep.subr.bf16.mxu0 0
    %121 = vmatpush1.bf16.msra.mxu0 0
    %122 = vmatprep.subr.bf16.mxu0 0
    %123 = vmatpush1.bf16.msra.mxu0 0
    %124 = vmatprep.subr.bf16.mxu0 0
    %125 = vmatpush1.bf16.msra.mxu0 0
    %126 = vmatprep.subr.bf16.mxu0 0
    %127 = vmatpush1.bf16.msra.mxu0 0
    %128 = vmatprep.subr.bf16.mxu0 0
    %129 = vmatpush1.bf16.msra.mxu0 0
    %130 = vmatprep.subr.bf16.mxu0 0
    %131 = vmatpush1.bf16.msra.mxu0 0
    %132 = vmatprep.subr.bf16.mxu0 0
    %133 = vmatpush1.bf16.msra.mxu0 0
    %134 = vmatprep.subr.bf16.mxu0 0
    %135 = vmatpush1.bf16.msra.mxu0 0
    %136 = vmatprep.subr.bf16.mxu0 0
    %137 = vmatpush1.bf16.msra.mxu0 0
    %138 = vmatprep.subr.bf16.mxu0 0
    %139 = vmatpush1.bf16.msra.mxu0 0
    %140 = vmatprep.mubr.bf16.mxu0 0
    %141 = vmatmul.mubr.bf16.gmra.mrb[0].mxu0 %v102
    %v142 = vpop.f32.mrb[0].mxu0
    %v143 = vadd.f32 0.0, %v142
    %v144 = vpop.f32.mrb[0].mxu0
    %v145 = vpop.f32.mrb[0].mxu0
    %v146 = vpop.f32.mrb[0].mxu0
    %147 = vdwg.mxu0
    %v150 = vunpack.c.l.b16 %v91
    %v151 = vunpack.c.l.b16 %v92
    %v152 = vpack.c.b16 %v151, %v150
    %vm154 = vcmask 130048
    %v156 = vsel %vm154, %v90, 0
    %158 = vmatprep.subr.bf16.mxu0 0
    %159 = vmatpush1.bf16.msra.mxu0 %v152
    %160 = vmatprep.subr.bf16.mxu0 0
    %161 = vmatpush1.bf16.msra.mxu0 0
    %162 = vmatprep.subr.bf16.mxu0 0
    %163 = vmatpush1.bf16.msra.mxu0 0
    %164 = vmatprep.subr.bf16.mxu0 0
    %165 = vmatpush1.bf16.msra.mxu0 0
    %166 = vmatprep.subr.bf16.mxu0 0
    %167 = vmatpush1.bf16.msra.mxu0 0
    %168 = vmatprep.subr.bf16.mxu0 0
    %169 = vmatpush1.bf16.msra.mxu0 0
    %170 = vmatprep.subr.bf16.mxu0 0
    %171 = vmatpush1.bf16.msra.mxu0 0
    %172 = vmatprep.subr.bf16.mxu0 0
    %173 = vmatpush1.bf16.msra.mxu0 0
    %174 = vmatprep.subr.bf16.mxu0 0
    %175 = vmatpush1.bf16.msra.mxu0 0
    %176 = vmatprep.subr.bf16.mxu0 0
    %177 = vmatpush1.bf16.msra.mxu0 0
    %178 = vmatprep.subr.bf16.mxu0 0
    %179 = vmatpush1.bf16.msra.mxu0 0
    %180 = vmatprep.subr.bf16.mxu0 0
    %181 = vmatpush1.bf16.msra.mxu0 0
    %182 = vmatprep.subr.bf16.mxu0 0
    %183 = vmatpush1.bf16.msra.mxu0 0
    %184 = vmatprep.subr.bf16.mxu0 0
    %185 = vmatpush1.bf16.msra.mxu0 0
    %186 = vmatprep.subr.bf16.mxu0 0
    %187 = vmatpush1.bf16.msra.mxu0 0
    %188 = vmatprep.subr.bf16.mxu0 0
    %189 = vmatpush1.bf16.msra.mxu0 0
    %190 = vmatprep.mubr.bf16.mxu0 0
    %191 = vmatmul.mubr.bf16.gmra.mrb[0].mxu0 %v156
    %v192 = vpop.f32.mrb[0].mxu0
    %v193 = vadd.f32 %v143, %v192
    %v194 = vpop.f32.mrb[0].mxu0
    %v195 = vpop.f32.mrb[0].mxu0
    %v196 = vpop.f32.mrb[0].mxu0
    %197 = vdwg.mxu0
    %v198 = vld [vmem:[%s4] sm:$0x1]
    %v200 = vlaneseq
    %v201 = vshrl.u32 %v200, 7
    %v202 = vsub.s32 0, %v201
    %v203 = vrot.slane %v198, %v202
    %v205 = vadd.f32 %v193, %v203
    %v206 = vmax.f32 %v205, 0.0
    %v207 = vpack.c.bf16 %v206, %v206
    %v208 = vld [vmem:[#allocation2] sm:$0xff]
    %v209 = vld [vmem:[#allocation2 + $0x8] sm:$0xff]
    %v210 = vld [vmem:[#allocation2 + $0x10] sm:$0xff]
    %v211 = vld [vmem:[#allocation2 + $0x18] sm:$0xff]
    %v212 = vld [vmem:[#allocation2 + $0x20] sm:$0xff]
    %v213 = vld [vmem:[#allocation2 + $0x28] sm:$0xff]
    %v214 = vld [vmem:[#allocation2 + $0x30] sm:$0xff]
    %v215 = vld [vmem:[#allocation2 + $0x38] sm:$0xff]
    %v216 = vld [vmem:[#allocation2 + $0x40] sm:$0xff]
    %v217 = vld [vmem:[#allocation2 + $0x48] sm:$0xff]
    %v218 = vld [vmem:[#allocation2 + $0x50] sm:$0xff]
    %v219 = vld [vmem:[#allocation2 + $0x58] sm:$0xff]
    %v220 = vld [vmem:[#allocation2 + $0x60] sm:$0xff]
    %v221 = vld [vmem:[#allocation2 + $0x68] sm:$0xff]
    %v222 = vld [vmem:[#allocation2 + $0x70] sm:$0xff]
    %v223 = vld [vmem:[#allocation2 + $0x78] sm:$0xff]
    %v224 = vld [vmem:[%s6] sm:$0x3]
    %v226 = vlaneseq
    %v227 = vshrl.u32 %v226, 7
    %v228 = vsub.s32 0, %v227
    %v229 = vrot.slane %v224, %v228
    %v230 = vlaneseq
    %v231 = vshrl.u32 %v230, 7
    %v232 = vsub.s32 1, %v231
    %v233 = vrot.slane %v224, %v232
    %v252 = vunpack.c.l.b16 %v208
    %v253 = vunpack.c.h.b16 %v208
    %v254 = vunpack.c.l.b16 %v209
    %v255 = vunpack.c.h.b16 %v209
    %v256 = vunpack.c.l.b16 %v210
    %v257 = vunpack.c.h.b16 %v210
    %v258 = vunpack.c.l.b16 %v211
    %v259 = vunpack.c.h.b16 %v211
    %v260 = vunpack.c.l.b16 %v212
    %v261 = vunpack.c.h.b16 %v212
    %v262 = vunpack.c.l.b16 %v213
    %v263 = vunpack.c.h.b16 %v213
    %v264 = vunpack.c.l.b16 %v214
    %v265 = vunpack.c.h.b16 %v214
    %v266 = vunpack.c.l.b16 %v215
    %v267 = vunpack.c.h.b16 %v215
    %v268 = vunpack.c.l.b16 %v216
    %v269 = vunpack.c.h.b16 %v216
    %v270 = vunpack.c.l.b16 %v217
    %v271 = vunpack.c.h.b16 %v217
    %v272 = vunpack.c.l.b16 %v218
    %v273 = vunpack.c.h.b16 %v218
    %v274 = vunpack.c.l.b16 %v219
    %v275 = vunpack.c.h.b16 %v219
    %v276 = vunpack.c.l.b16 %v220
    %v277 = vunpack.c.h.b16 %v220
    %v278 = vunpack.c.l.b16 %v221
    %v279 = vunpack.c.h.b16 %v221
    %v280 = vunpack.c.l.b16 %v222
    %v281 = vunpack.c.h.b16 %v222
    %v282 = vunpack.c.l.b16 %v223
    %v283 = vunpack.c.h.b16 %v223
    %v284 = vpack.c.b16 %v254, %v252
    %v285 = vpack.c.b16 %v255, %v253
    %v286 = vpack.c.b16 %v258, %v256
    %v287 = vpack.c.b16 %v259, %v257
    %v288 = vpack.c.b16 %v262, %v260
    %v289 = vpack.c.b16 %v263, %v261
    %v290 = vpack.c.b16 %v266, %v264
    %v291 = vpack.c.b16 %v267, %v265
    %v292 = vpack.c.b16 %v270, %v268
    %v293 = vpack.c.b16 %v271, %v269
    %v294 = vpack.c.b16 %v274, %v272
    %v295 = vpack.c.b16 %v275, %v273
    %v296 = vpack.c.b16 %v278, %v276
    %v297 = vpack.c.b16 %v279, %v277
    %v298 = vpack.c.b16 %v282, %v280
    %v299 = vpack.c.b16 %v283, %v281
    %316 = vmatprep.subr.bf16.mxu0 %v285
    %317 = vmatpush1.bf16.msra.mxu0 %v284
    %318 = vmatprep.subr.bf16.mxu0 %v287
    %319 = vmatpush1.bf16.msra.mxu0 %v286
    %320 = vmatprep.subr.bf16.mxu0 %v289
    %321 = vmatpush1.bf16.msra.mxu0 %v288
    %322 = vmatprep.subr.bf16.mxu0 %v291
    %323 = vmatpush1.bf16.msra.mxu0 %v290
    %324 = vmatprep.subr.bf16.mxu0 %v293
    %325 = vmatpush1.bf16.msra.mxu0 %v292
    %326 = vmatprep.subr.bf16.mxu0 %v295
    %327 = vmatpush1.bf16.msra.mxu0 %v294
    %328 = vmatprep.subr.bf16.mxu0 %v297
    %329 = vmatpush1.bf16.msra.mxu0 %v296
    %330 = vmatprep.subr.bf16.mxu0 %v299
    %331 = vmatpush1.bf16.msra.mxu0 %v298
    %332 = vmatprep.subr.bf16.mxu0 0
    %333 = vmatpush1.bf16.msra.mxu0 0
    %334 = vmatprep.subr.bf16.mxu0 0
    %335 = vmatpush1.bf16.msra.mxu0 0
    %336 = vmatprep.subr.bf16.mxu0 0
    %337 = vmatpush1.bf16.msra.mxu0 0
    %338 = vmatprep.subr.bf16.mxu0 0
    %339 = vmatpush1.bf16.msra.mxu0 0
    %340 = vmatprep.subr.bf16.mxu0 0
    %341 = vmatpush1.bf16.msra.mxu0 0
    %342 = vmatprep.subr.bf16.mxu0 0
    %343 = vmatpush1.bf16.msra.mxu0 0
    %344 = vmatprep.subr.bf16.mxu0 0
    %345 = vmatpush1.bf16.msra.mxu0 0
    %346 = vmatprep.subr.bf16.mxu0 0
    %347 = vmatpush1.bf16.msra.mxu0 0
    %348 = vmatprep.mubr.bf16.mxu0 0
    %349 = vmatmul.mubr.bf16.gmra.mrb[0].mxu0 %v207
    %v350 = vpop.f32.mrb[0].mxu0
    %v351 = vadd.f32 %v229, %v350
    %v352 = vpop.f32.mrb[0].mxu0
    %v353 = vadd.f32 %v233, %v352
    %v354 = vpop.f32.mrb[0].mxu0
    %v355 = vpop.f32.mrb[0].mxu0
    %356 = vdwg.mxu0
    %v357 = vmax.f32 %v351, 0.0
    %v358 = vmax.f32 %v353, 0.0
    %v359 = vpack.c.bf16 %v357, %v357
    %v360 = vpack.c.bf16 %v358, %v358
    %v361 = vld [vmem:[#allocation4] sm:$0xff]
    %v362 = vld [vmem:[#allocation4 + $0x8] sm:$0xff]
    %v363 = vld [vmem:[#allocation4 + $0x10] sm:$0xff]
    %v364 = vld [vmem:[#allocation4 + $0x18] sm:$0xff]
    %v365 = vld [vmem:[#allocation4 + $0x20] sm:$0xff]
    %v366 = vld [vmem:[#allocation4 + $0x28] sm:$0xff]
    %v367 = vld [vmem:[#allocation4 + $0x30] sm:$0xff]
    %v368 = vld [vmem:[#allocation4 + $0x38] sm:$0xff]
    %v369 = vld [vmem:[#allocation4 + $0x40] sm:$0xff]
    %v370 = vld [vmem:[#allocation4 + $0x48] sm:$0xff]
    %v371 = vld [vmem:[#allocation4 + $0x50] sm:$0xff]
    %v372 = vld [vmem:[#allocation4 + $0x58] sm:$0xff]
    %v373 = vld [vmem:[#allocation4 + $0x60] sm:$0xff]
    %v374 = vld [vmem:[#allocation4 + $0x68] sm:$0xff]
    %v375 = vld [vmem:[#allocation4 + $0x70] sm:$0xff]
    %v376 = vld [vmem:[#allocation4 + $0x78] sm:$0xff]
    %v377 = vld [vmem:[#allocation4 + $0x80] sm:$0xff]
    %v378 = vld [vmem:[#allocation4 + $0x88] sm:$0xff]
    %v379 = vld [vmem:[#allocation4 + $0x90] sm:$0xff]
    %v380 = vld [vmem:[#allocation4 + $0x98] sm:$0xff]
    %v381 = vld [vmem:[#allocation4 + $0xa0] sm:$0xff]
    %v382 = vld [vmem:[#allocation4 + $0xa8] sm:$0xff]
    %v383 = vld [vmem:[#allocation4 + $0xb0] sm:$0xff]
    %v384 = vld [vmem:[#allocation4 + $0xb8] sm:$0xff]
    %v385 = vld [vmem:[#allocation4 + $0xc0] sm:$0xff]
    %v386 = vld [vmem:[#allocation4 + $0xc8] sm:$0xff]
    %v387 = vld [vmem:[#allocation4 + $0xd0] sm:$0xff]
    %v388 = vld [vmem:[#allocation4 + $0xd8] sm:$0xff]
    %v389 = vld [vmem:[#allocation4 + $0xe0] sm:$0xff]
    %v390 = vld [vmem:[#allocation4 + $0xe8] sm:$0xff]
    %v391 = vld [vmem:[#allocation4 + $0xf0] sm:$0xff]
    %v392 = vld [vmem:[#allocation4 + $0xf8] sm:$0xff]
    %v393 = vld [vmem:[#allocation4 + $0x100] sm:$0xff]
    %v394 = vld [vmem:[#allocation4 + $0x108] sm:$0xff]
    %v395 = vld [vmem:[#allocation4 + $0x110] sm:$0xff]
    %v396 = vld [vmem:[#allocation4 + $0x118] sm:$0xff]
    %v397 = vld [vmem:[#allocation4 + $0x120] sm:$0xff]
    %v398 = vld [vmem:[#allocation4 + $0x128] sm:$0xff]
    %v399 = vld [vmem:[#allocation4 + $0x130] sm:$0xff]
    %v400 = vld [vmem:[#allocation4 + $0x138] sm:$0xff]
    %v401 = vld [vmem:[#allocation4 + $0x140] sm:$0xff]
    %v402 = vld [vmem:[#allocation4 + $0x148] sm:$0xff]
    %v403 = vld [vmem:[#allocation4 + $0x150] sm:$0xff]
    %v404 = vld [vmem:[#allocation4 + $0x158] sm:$0xff]
    %v405 = vld [vmem:[#allocation4 + $0x160] sm:$0xff]
    %v406 = vld [vmem:[#allocation4 + $0x168] sm:$0xff]
    %v407 = vld [vmem:[#allocation4 + $0x170] sm:$0xff]
    %v408 = vld [vmem:[#allocation4 + $0x178] sm:$0xff]
    %v409 = vld [vmem:[#allocation4 + $0x180] sm:$0xff]
    %v410 = vld [vmem:[#allocation4 + $0x188] sm:$0xff]
    %v411 = vld [vmem:[#allocation4 + $0x190] sm:$0xff]
    %v412 = vld [vmem:[#allocation4 + $0x198] sm:$0xff]
    %v413 = vld [vmem:[#allocation4 + $0x1a0] sm:$0xff]
    %v414 = vld [vmem:[#allocation4 + $0x1a8] sm:$0xff]
    %v415 = vld [vmem:[#allocation4 + $0x1b0] sm:$0xff]
    %v416 = vld [vmem:[#allocation4 + $0x1b8] sm:$0xff]
    %v417 = vld [vmem:[#allocation4 + $0x1c0] sm:$0xff]
    %v418 = vld [vmem:[#allocation4 + $0x1c8] sm:$0xff]
    %v419 = vld [vmem:[#allocation4 + $0x1d0] sm:$0xff]
    %v420 = vld [vmem:[#allocation4 + $0x1d8] sm:$0xff]
    %v421 = vld [vmem:[#allocation4 + $0x1e0] sm:$0xff]
    %v422 = vld [vmem:[#allocation4 + $0x1e8] sm:$0xff]
    %v423 = vld [vmem:[#allocation4 + $0x1f0] sm:$0xff]
    %v424 = vld [vmem:[#allocation4 + $0x1f8] sm:$0xff]
    %v425 = vld [vmem:[%s8] sm:$0xf]
    %v427 = vlaneseq
    %v428 = vshrl.u32 %v427, 7
    %v429 = vsub.s32 0, %v428
    %v430 = vrot.slane %v425, %v429
    %v431 = vlaneseq
    %v432 = vshrl.u32 %v431, 7
    %v433 = vsub.s32 1, %v432
    %v434 = vrot.slane %v425, %v433
    %v435 = vlaneseq
    %v436 = vshrl.u32 %v435, 7
    %v437 = vsub.s32 2, %v436
    %v438 = vrot.slane %v425, %v437
    %v439 = vlaneseq
    %v440 = vshrl.u32 %v439, 7
    %v441 = vsub.s32 3, %v440
    %v442 = vrot.slane %v425, %v441
    %v511 = vunpack.c.l.b16 %v361
    %v512 = vunpack.c.h.b16 %v361
    %v513 = vunpack.c.l.b16 %v362
    %v514 = vunpack.c.h.b16 %v362
    %v515 = vunpack.c.l.b16 %v363
    %v516 = vunpack.c.h.b16 %v363
    %v517 = vunpack.c.l.b16 %v364
    %v518 = vunpack.c.h.b16 %v364
    %v519 = vunpack.c.l.b16 %v365
    %v520 = vunpack.c.h.b16 %v365
    %v521 = vunpack.c.l.b16 %v366
    %v522 = vunpack.c.h.b16 %v366
    %v523 = vunpack.c.l.b16 %v367
    %v524 = vunpack.c.h.b16 %v367
    %v525 = vunpack.c.l.b16 %v368
    %v526 = vunpack.c.h.b16 %v368
    %v527 = vunpack.c.l.b16 %v369
    %v528 = vunpack.c.h.b16 %v369
    %v529 = vunpack.c.l.b16 %v370
    %v530 = vunpack.c.h.b16 %v370
    %v531 = vunpack.c.l.b16 %v371
    %v532 = vunpack.c.h.b16 %v371
    %v533 = vunpack.c.l.b16 %v372
    %v534 = vunpack.c.h.b16 %v372
    %v535 = vunpack.c.l.b16 %v373
    %v536 = vunpack.c.h.b16 %v373
    %v537 = vunpack.c.l.b16 %v374
    %v538 = vunpack.c.h.b16 %v374
    %v539 = vunpack.c.l.b16 %v375
    %v540 = vunpack.c.h.b16 %v375
    %v541 = vunpack.c.l.b16 %v376
    %v542 = vunpack.c.h.b16 %v376
    %v543 = vunpack.c.l.b16 %v377
    %v544 = vunpack.c.h.b16 %v377
    %v545 = vunpack.c.l.b16 %v378
    %v546 = vunpack.c.h.b16 %v378
    %v547 = vunpack.c.l.b16 %v379
    %v548 = vunpack.c.h.b16 %v379
    %v549 = vunpack.c.l.b16 %v380
    %v550 = vunpack.c.h.b16 %v380
    %v551 = vunpack.c.l.b16 %v381
    %v552 = vunpack.c.h.b16 %v381
    %v553 = vunpack.c.l.b16 %v382
    %v554 = vunpack.c.h.b16 %v382
    %v555 = vunpack.c.l.b16 %v383
    %v556 = vunpack.c.h.b16 %v383
    %v557 = vunpack.c.l.b16 %v384
    %v558 = vunpack.c.h.b16 %v384
    %v559 = vunpack.c.l.b16 %v385
    %v560 = vunpack.c.h.b16 %v385
    %v561 = vunpack.c.l.b16 %v386
    %v562 = vunpack.c.h.b16 %v386
    %v563 = vunpack.c.l.b16 %v387
    %v564 = vunpack.c.h.b16 %v387
    %v565 = vunpack.c.l.b16 %v388
    %v566 = vunpack.c.h.b16 %v388
    %v567 = vunpack.c.l.b16 %v389
    %v568 = vunpack.c.h.b16 %v389
    %v569 = vunpack.c.l.b16 %v390
    %v570 = vunpack.c.h.b16 %v390
    %v571 = vunpack.c.l.b16 %v391
    %v572 = vunpack.c.h.b16 %v391
    %v573 = vunpack.c.l.b16 %v392
    %v574 = vunpack.c.h.b16 %v392
    %v575 = vunpack.c.l.b16 %v393
    %v576 = vunpack.c.h.b16 %v393
    %v577 = vunpack.c.l.b16 %v394
    %v578 = vunpack.c.h.b16 %v394
    %v579 = vunpack.c.l.b16 %v395
    %v580 = vunpack.c.h.b16 %v395
    %v581 = vunpack.c.l.b16 %v396
    %v582 = vunpack.c.h.b16 %v396
    %v583 = vunpack.c.l.b16 %v397
    %v584 = vunpack.c.h.b16 %v397
    %v585 = vunpack.c.l.b16 %v398
    %v586 = vunpack.c.h.b16 %v398
    %v587 = vunpack.c.l.b16 %v399
    %v588 = vunpack.c.h.b16 %v399
    %v589 = vunpack.c.l.b16 %v400
    %v590 = vunpack.c.h.b16 %v400
    %v591 = vunpack.c.l.b16 %v401
    %v592 = vunpack.c.h.b16 %v401
    %v593 = vunpack.c.l.b16 %v402
    %v594 = vunpack.c.h.b16 %v402
    %v595 = vunpack.c.l.b16 %v403
    %v596 = vunpack.c.h.b16 %v403
    %v597 = vunpack.c.l.b16 %v404
    %v598 = vunpack.c.h.b16 %v404
    %v599 = vunpack.c.l.b16 %v405
    %v600 = vunpack.c.h.b16 %v405
    %v601 = vunpack.c.l.b16 %v406
    %v602 = vunpack.c.h.b16 %v406
    %v603 = vunpack.c.l.b16 %v407
    %v604 = vunpack.c.h.b16 %v407
    %v605 = vunpack.c.l.b16 %v408
    %v606 = vunpack.c.h.b16 %v408
    %v607 = vunpack.c.l.b16 %v409
    %v608 = vunpack.c.h.b16 %v409
    %v609 = vunpack.c.l.b16 %v410
    %v610 = vunpack.c.h.b16 %v410
    %v611 = vunpack.c.l.b16 %v411
    %v612 = vunpack.c.h.b16 %v411
    %v613 = vunpack.c.l.b16 %v412
    %v614 = vunpack.c.h.b16 %v412
    %v615 = vunpack.c.l.b16 %v413
    %v616 = vunpack.c.h.b16 %v413
    %v617 = vunpack.c.l.b16 %v414
    %v618 = vunpack.c.h.b16 %v414
    %v619 = vunpack.c.l.b16 %v415
    %v620 = vunpack.c.h.b16 %v415
    %v621 = vunpack.c.l.b16 %v416
    %v622 = vunpack.c.h.b16 %v416
    %v623 = vunpack.c.l.b16 %v417
    %v624 = vunpack.c.h.b16 %v417
    %v625 = vunpack.c.l.b16 %v418
    %v626 = vunpack.c.h.b16 %v418
    %v627 = vunpack.c.l.b16 %v419
    %v628 = vunpack.c.h.b16 %v419
    %v629 = vunpack.c.l.b16 %v420
    %v630 = vunpack.c.h.b16 %v420
    %v631 = vunpack.c.l.b16 %v421
    %v632 = vunpack.c.h.b16 %v421
    %v633 = vunpack.c.l.b16 %v422
    %v634 = vunpack.c.h.b16 %v422
    %v635 = vunpack.c.l.b16 %v423
    %v636 = vunpack.c.h.b16 %v423
    %v637 = vunpack.c.l.b16 %v424
    %v638 = vunpack.c.h.b16 %v424
    %v639 = vpack.c.b16 %v515, %v511
    %v640 = vpack.c.b16 %v516, %v512
    %v641 = vpack.c.b16 %v517, %v513
    %v642 = vpack.c.b16 %v518, %v514
    %v643 = vpack.c.b16 %v523, %v519
    %v644 = vpack.c.b16 %v524, %v520
    %v645 = vpack.c.b16 %v525, %v521
    %v646 = vpack.c.b16 %v526, %v522
    %v647 = vpack.c.b16 %v531, %v527
    %v648 = vpack.c.b16 %v532, %v528
    %v649 = vpack.c.b16 %v533, %v529
    %v650 = vpack.c.b16 %v534, %v530
    %v651 = vpack.c.b16 %v539, %v535
    %v652 = vpack.c.b16 %v540, %v536
    %v653 = vpack.c.b16 %v541, %v537
    %v654 = vpack.c.b16 %v542, %v538
    %v655 = vpack.c.b16 %v547, %v543
    %v656 = vpack.c.b16 %v548, %v544
    %v657 = vpack.c.b16 %v549, %v545
    %v658 = vpack.c.b16 %v550, %v546
    %v659 = vpack.c.b16 %v555, %v551
    %v660 = vpack.c.b16 %v556, %v552
    %v661 = vpack.c.b16 %v557, %v553
    %v662 = vpack.c.b16 %v558, %v554
    %v663 = vpack.c.b16 %v563, %v559
    %v664 = vpack.c.b16 %v564, %v560
    %v665 = vpack.c.b16 %v565, %v561
    %v666 = vpack.c.b16 %v566, %v562
    %v667 = vpack.c.b16 %v571, %v567
    %v668 = vpack.c.b16 %v572, %v568
    %v669 = vpack.c.b16 %v573, %v569
    %v670 = vpack.c.b16 %v574, %v570
    %v671 = vpack.c.b16 %v579, %v575
    %v672 = vpack.c.b16 %v580, %v576
    %v673 = vpack.c.b16 %v581, %v577
    %v674 = vpack.c.b16 %v582, %v578
    %v675 = vpack.c.b16 %v587, %v583
    %v676 = vpack.c.b16 %v588, %v584
    %v677 = vpack.c.b16 %v589, %v585
    %v678 = vpack.c.b16 %v590, %v586
    %v679 = vpack.c.b16 %v595, %v591
    %v680 = vpack.c.b16 %v596, %v592
    %v681 = vpack.c.b16 %v597, %v593
    %v682 = vpack.c.b16 %v598, %v594
    %v683 = vpack.c.b16 %v603, %v599
    %v684 = vpack.c.b16 %v604, %v600
    %v685 = vpack.c.b16 %v605, %v601
    %v686 = vpack.c.b16 %v606, %v602
    %v687 = vpack.c.b16 %v611, %v607
    %v688 = vpack.c.b16 %v612, %v608
    %v689 = vpack.c.b16 %v613, %v609
    %v690 = vpack.c.b16 %v614, %v610
    %v691 = vpack.c.b16 %v619, %v615
    %v692 = vpack.c.b16 %v620, %v616
    %v693 = vpack.c.b16 %v621, %v617
    %v694 = vpack.c.b16 %v622, %v618
    %v695 = vpack.c.b16 %v627, %v623
    %v696 = vpack.c.b16 %v628, %v624
    %v697 = vpack.c.b16 %v629, %v625
    %v698 = vpack.c.b16 %v630, %v626
    %v699 = vpack.c.b16 %v635, %v631
    %v700 = vpack.c.b16 %v636, %v632
    %v701 = vpack.c.b16 %v637, %v633
    %v702 = vpack.c.b16 %v638, %v634
    %767 = vmatprep.subr.bf16.mxu0 %v640
    %768 = vmatpush1.bf16.msra.mxu0 %v639
    %769 = vmatprep.subr.bf16.mxu0 %v644
    %770 = vmatpush1.bf16.msra.mxu0 %v643
    %771 = vmatprep.subr.bf16.mxu0 %v648
    %772 = vmatpush1.bf16.msra.mxu0 %v647
    %773 = vmatprep.subr.bf16.mxu0 %v652
    %774 = vmatpush1.bf16.msra.mxu0 %v651
    %775 = vmatprep.subr.bf16.mxu0 %v656
    %776 = vmatpush1.bf16.msra.mxu0 %v655
    %777 = vmatprep.subr.bf16.mxu0 %v660
    %778 = vmatpush1.bf16.msra.mxu0 %v659
    %779 = vmatprep.subr.bf16.mxu0 %v664
    %780 = vmatpush1.bf16.msra.mxu0 %v663
    %781 = vmatprep.subr.bf16.mxu0 %v668
    %782 = vmatpush1.bf16.msra.mxu0 %v667
    %783 = vmatprep.subr.bf16.mxu0 %v672
    %784 = vmatpush1.bf16.msra.mxu0 %v671
    %785 = vmatprep.subr.bf16.mxu0 %v676
    %786 = vmatpush1.bf16.msra.mxu0 %v675
    %787 = vmatprep.subr.bf16.mxu0 %v680
    %788 = vmatpush1.bf16.msra.mxu0 %v679
    %789 = vmatprep.subr.bf16.mxu0 %v684
    %790 = vmatpush1.bf16.msra.mxu0 %v683
    %791 = vmatprep.subr.bf16.mxu0 %v688
    %792 = vmatpush1.bf16.msra.mxu0 %v687
    %793 = vmatprep.subr.bf16.mxu0 %v692
    %794 = vmatpush1.bf16.msra.mxu0 %v691
    %795 = vmatprep.subr.bf16.mxu0 %v696
    %796 = vmatpush1.bf16.msra.mxu0 %v695
    %797 = vmatprep.subr.bf16.mxu0 %v700
    %798 = vmatpush1.bf16.msra.mxu0 %v699
    %799 = vmatprep.mubr.bf16.mxu0 %v360
    %800 = vmatmul.mubr.bf16.gmra.mrb[0].mxu0 %v359
    %v801 = vpop.f32.mrb[0].mxu0
    %v802 = vadd.f32 %v430, %v801
    %v803 = vpop.f32.mrb[0].mxu0
    %v804 = vadd.f32 %v434, %v803
    %v805 = vpop.f32.mrb[0].mxu0
    %v806 = vpop.f32.mrb[0].mxu0
    %807 = vdwg.mxu0
    %808 = vmatprep.subr.bf16.mxu0 %v642
    %809 = vmatpush1.bf16.msra.mxu0 %v641
    %810 = vmatprep.subr.bf16.mxu0 %v646
    %811 = vmatpush1.bf16.msra.mxu0 %v645
    %812 = vmatprep.subr.bf16.mxu0 %v650
    %813 = vmatpush1.bf16.msra.mxu0 %v649
    %814 = vmatprep.subr.bf16.mxu0 %v654
    %815 = vmatpush1.bf16.msra.mxu0 %v653
    %816 = vmatprep.subr.bf16.mxu0 %v658
    %817 = vmatpush1.bf16.msra.mxu0 %v657
    %818 = vmatprep.subr.bf16.mxu0 %v662
    %819 = vmatpush1.bf16.msra.mxu0 %v661
    %820 = vmatprep.subr.bf16.mxu0 %v666
    %821 = vmatpush1.bf16.msra.mxu0 %v665
    %822 = vmatprep.subr.bf16.mxu0 %v670
    %823 = vmatpush1.bf16.msra.mxu0 %v669
    %824 = vmatprep.subr.bf16.mxu0 %v674
    %825 = vmatpush1.bf16.msra.mxu0 %v673
    %826 = vmatprep.subr.bf16.mxu0 %v678
    %827 = vmatpush1.bf16.msra.mxu0 %v677
    %828 = vmatprep.subr.bf16.mxu0 %v682
    %829 = vmatpush1.bf16.msra.mxu0 %v681
    %830 = vmatprep.subr.bf16.mxu0 %v686
    %831 = vmatpush1.bf16.msra.mxu0 %v685
    %832 = vmatprep.subr.bf16.mxu0 %v690
    %833 = vmatpush1.bf16.msra.mxu0 %v689
    %834 = vmatprep.subr.bf16.mxu0 %v694
    %835 = vmatpush1.bf16.msra.mxu0 %v693
    %836 = vmatprep.subr.bf16.mxu0 %v698
    %837 = vmatpush1.bf16.msra.mxu0 %v697
    %838 = vmatprep.subr.bf16.mxu0 %v702
    %839 = vmatpush1.bf16.msra.mxu0 %v701
    %840 = vmatprep.mubr.bf16.mxu0 %v360
    %841 = vmatmul.mubr.bf16.gmra.mrb[0].mxu0 %v359
    %v842 = vpop.f32.mrb[0].mxu0
    %v843 = vadd.f32 %v438, %v842
    %v844 = vpop.f32.mrb[0].mxu0
    %v845 = vadd.f32 %v442, %v844
    %v846 = vpop.f32.mrb[0].mxu0
    %v847 = vpop.f32.mrb[0].mxu0
    %848 = vdwg.mxu0
    %v849 = vmax.f32 %v802, 0.0
    %v850 = vmax.f32 %v804, 0.0
    %v851 = vmax.f32 %v843, 0.0
    %v852 = vmax.f32 %v845, 0.0
    %v853 = vpack.c.bf16 %v849, %v849
    %v854 = vpack.c.bf16 %v850, %v850
    %v855 = vpack.c.bf16 %v851, %v851
    %v856 = vpack.c.bf16 %v852, %v852
    %v857 = vld [vmem:[#allocation6] sm:$0xf]
    %v858 = vld [vmem:[#allocation6 + $0x4] sm:$0xf]
    %v859 = vld [vmem:[#allocation6 + $0x8] sm:$0xf]
    %v860 = vld [vmem:[#allocation6 + $0xc] sm:$0xf]
    %v861 = vld [vmem:[#allocation6 + $0x10] sm:$0xf]
    %v862 = vld [vmem:[#allocation6 + $0x14] sm:$0xf]
    %v863 = vld [vmem:[#allocation6 + $0x18] sm:$0xf]
    %v864 = vld [vmem:[#allocation6 + $0x1c] sm:$0xf]
    %v865 = vld [vmem:[#allocation6 + $0x20] sm:$0xf]
    %v866 = vld [vmem:[#allocation6 + $0x24] sm:$0xf]
    %v867 = vld [vmem:[#allocation6 + $0x28] sm:$0xf]
    %v868 = vld [vmem:[#allocation6 + $0x2c] sm:$0xf]
    %v869 = vld [vmem:[#allocation6 + $0x30] sm:$0xf]
    %v870 = vld [vmem:[#allocation6 + $0x34] sm:$0xf]
    %v871 = vld [vmem:[#allocation6 + $0x38] sm:$0xf]
    %v872 = vld [vmem:[#allocation6 + $0x3c] sm:$0xf]
    %v873 = vld [vmem:[#allocation6 + $0x40] sm:$0xf]
    %v874 = vld [vmem:[#allocation6 + $0x44] sm:$0xf]
    %v875 = vld [vmem:[#allocation6 + $0x48] sm:$0xf]
    %v876 = vld [vmem:[#allocation6 + $0x4c] sm:$0xf]
    %v877 = vld [vmem:[#allocation6 + $0x50] sm:$0xf]
    %v878 = vld [vmem:[#allocation6 + $0x54] sm:$0xf]
    %v879 = vld [vmem:[#allocation6 + $0x58] sm:$0xf]
    %v880 = vld [vmem:[#allocation6 + $0x5c] sm:$0xf]
    %v881 = vld [vmem:[#allocation6 + $0x60] sm:$0xf]
    %v882 = vld [vmem:[#allocation6 + $0x64] sm:$0xf]
    %v883 = vld [vmem:[#allocation6 + $0x68] sm:$0xf]
    %v884 = vld [vmem:[#allocation6 + $0x6c] sm:$0xf]
    %v885 = vld [vmem:[#allocation6 + $0x70] sm:$0xf]
    %v886 = vld [vmem:[#allocation6 + $0x74] sm:$0xf]
    %v887 = vld [vmem:[#allocation6 + $0x78] sm:$0xf]
    %v888 = vld [vmem:[#allocation6 + $0x7c] sm:$0xf]
    %v889 = vld [vmem:[#allocation6 + $0x80] sm:$0xf]
    %v890 = vld [vmem:[#allocation6 + $0x84] sm:$0xf]
    %v891 = vld [vmem:[#allocation6 + $0x88] sm:$0xf]
    %v892 = vld [vmem:[#allocation6 + $0x8c] sm:$0xf]
    %v893 = vld [vmem:[#allocation6 + $0x90] sm:$0xf]
    %v894 = vld [vmem:[#allocation6 + $0x94] sm:$0xf]
    %v895 = vld [vmem:[#allocation6 + $0x98] sm:$0xf]
    %v896 = vld [vmem:[#allocation6 + $0x9c] sm:$0xf]
    %v897 = vld [vmem:[#allocation6 + $0xa0] sm:$0xf]
    %v898 = vld [vmem:[#allocation6 + $0xa4] sm:$0xf]
    %v899 = vld [vmem:[#allocation6 + $0xa8] sm:$0xf]
    %v900 = vld [vmem:[#allocation6 + $0xac] sm:$0xf]
    %v901 = vld [vmem:[#allocation6 + $0xb0] sm:$0xf]
    %v902 = vld [vmem:[#allocation6 + $0xb4] sm:$0xf]
    %v903 = vld [vmem:[#allocation6 + $0xb8] sm:$0xf]
    %v904 = vld [vmem:[#allocation6 + $0xbc] sm:$0xf]
    %v905 = vld [vmem:[#allocation6 + $0xc0] sm:$0xf]
    %v906 = vld [vmem:[#allocation6 + $0xc4] sm:$0xf]
    %v907 = vld [vmem:[#allocation6 + $0xc8] sm:$0xf]
    %v908 = vld [vmem:[#allocation6 + $0xcc] sm:$0xf]
    %v909 = vld [vmem:[#allocation6 + $0xd0] sm:$0xf]
    %v910 = vld [vmem:[#allocation6 + $0xd4] sm:$0xf]
    %v911 = vld [vmem:[#allocation6 + $0xd8] sm:$0xf]
    %v912 = vld [vmem:[#allocation6 + $0xdc] sm:$0xf]
    %v913 = vld [vmem:[#allocation6 + $0xe0] sm:$0xf]
    %v914 = vld [vmem:[#allocation6 + $0xe4] sm:$0xf]
    %v915 = vld [vmem:[#allocation6 + $0xe8] sm:$0xf]
    %v916 = vld [vmem:[#allocation6 + $0xec] sm:$0xf]
    %v917 = vld [vmem:[#allocation6 + $0xf0] sm:$0xf]
    %v918 = vld [vmem:[#allocation6 + $0xf4] sm:$0xf]
    %v919 = vld [vmem:[#allocation6 + $0xf8] sm:$0xf]
    %v920 = vld [vmem:[#allocation6 + $0xfc] sm:$0xf]
    %v921 = vld [vmem:[%s10] sm:$0x1]
    %v923 = vlaneseq
    %v924 = vshrl.u32 %v923, 7
    %v925 = vsub.s32 0, %v924
    %v926 = vrot.slane %v921, %v925
    %v992 = vunpack.c.l.b16 %v857
    %v993 = vunpack.c.l.b16 %v858
    %v994 = vunpack.c.l.b16 %v859
    %v995 = vunpack.c.l.b16 %v860
    %v996 = vunpack.c.l.b16 %v861
    %v997 = vunpack.c.l.b16 %v862
    %v998 = vunpack.c.l.b16 %v863
    %v999 = vunpack.c.l.b16 %v864
    %v1000 = vunpack.c.l.b16 %v865
    %v1001 = vunpack.c.l.b16 %v866
    %v1002 = vunpack.c.l.b16 %v867
    %v1003 = vunpack.c.l.b16 %v868
    %v1004 = vunpack.c.l.b16 %v869
    %v1005 = vunpack.c.l.b16 %v870
    %v1006 = vunpack.c.l.b16 %v871
    %v1007 = vunpack.c.l.b16 %v872
    %v1008 = vunpack.c.l.b16 %v873
    %v1009 = vunpack.c.l.b16 %v874
    %v1010 = vunpack.c.l.b16 %v875
    %v1011 = vunpack.c.l.b16 %v876
    %v1012 = vunpack.c.l.b16 %v877
    %v1013 = vunpack.c.l.b16 %v878
    %v1014 = vunpack.c.l.b16 %v879
    %v1015 = vunpack.c.l.b16 %v880
    %v1016 = vunpack.c.l.b16 %v881
    %v1017 = vunpack.c.l.b16 %v882
    %v1018 = vunpack.c.l.b16 %v883
    %v1019 = vunpack.c.l.b16 %v884
    %v1020 = vunpack.c.l.b16 %v885
    %v1021 = vunpack.c.l.b16 %v886
    %v1022 = vunpack.c.l.b16 %v887
    %v1023 = vunpack.c.l.b16 %v888
    %v1024 = vunpack.c.l.b16 %v889
    %v1025 = vunpack.c.l.b16 %v890
    %v1026 = vunpack.c.l.b16 %v891
    %v1027 = vunpack.c.l.b16 %v892
    %v1028 = vunpack.c.l.b16 %v893
    %v1029 = vunpack.c.l.b16 %v894
    %v1030 = vunpack.c.l.b16 %v895
    %v1031 = vunpack.c.l.b16 %v896
    %v1032 = vunpack.c.l.b16 %v897
    %v1033 = vunpack.c.l.b16 %v898
    %v1034 = vunpack.c.l.b16 %v899
    %v1035 = vunpack.c.l.b16 %v900
    %v1036 = vunpack.c.l.b16 %v901
    %v1037 = vunpack.c.l.b16 %v902
    %v1038 = vunpack.c.l.b16 %v903
    %v1039 = vunpack.c.l.b16 %v904
    %v1040 = vunpack.c.l.b16 %v905
    %v1041 = vunpack.c.l.b16 %v906
    %v1042 = vunpack.c.l.b16 %v907
    %v1043 = vunpack.c.l.b16 %v908
    %v1044 = vunpack.c.l.b16 %v909
    %v1045 = vunpack.c.l.b16 %v910
    %v1046 = vunpack.c.l.b16 %v911
    %v1047 = vunpack.c.l.b16 %v912
    %v1048 = vunpack.c.l.b16 %v913
    %v1049 = vunpack.c.l.b16 %v914
    %v1050 = vunpack.c.l.b16 %v915
    %v1051 = vunpack.c.l.b16 %v916
    %v1052 = vunpack.c.l.b16 %v917
    %v1053 = vunpack.c.l.b16 %v918
    %v1054 = vunpack.c.l.b16 %v919
    %v1055 = vunpack.c.l.b16 %v920
    %v1056 = vpack.c.b16 %v993, %v992
    %v1057 = vpack.c.b16 %v995, %v994
    %v1058 = vpack.c.b16 %v997, %v996
    %v1059 = vpack.c.b16 %v999, %v998
    %v1060 = vpack.c.b16 %v1001, %v1000
    %v1061 = vpack.c.b16 %v1003, %v1002
    %v1062 = vpack.c.b16 %v1005, %v1004
    %v1063 = vpack.c.b16 %v1007, %v1006
    %v1064 = vpack.c.b16 %v1009, %v1008
    %v1065 = vpack.c.b16 %v1011, %v1010
    %v1066 = vpack.c.b16 %v1013, %v1012
    %v1067 = vpack.c.b16 %v1015, %v1014
    %v1068 = vpack.c.b16 %v1017, %v1016
    %v1069 = vpack.c.b16 %v1019, %v1018
    %v1070 = vpack.c.b16 %v1021, %v1020
    %v1071 = vpack.c.b16 %v1023, %v1022
    %v1072 = vpack.c.b16 %v1025, %v1024
    %v1073 = vpack.c.b16 %v1027, %v1026
    %v1074 = vpack.c.b16 %v1029, %v1028
    %v1075 = vpack.c.b16 %v1031, %v1030
    %v1076 = vpack.c.b16 %v1033, %v1032
    %v1077 = vpack.c.b16 %v1035, %v1034
    %v1078 = vpack.c.b16 %v1037, %v1036
    %v1079 = vpack.c.b16 %v1039, %v1038
    %v1080 = vpack.c.b16 %v1041, %v1040
    %v1081 = vpack.c.b16 %v1043, %v1042
    %v1082 = vpack.c.b16 %v1045, %v1044
    %v1083 = vpack.c.b16 %v1047, %v1046
    %v1084 = vpack.c.b16 %v1049, %v1048
    %v1085 = vpack.c.b16 %v1051, %v1050
    %v1086 = vpack.c.b16 %v1053, %v1052
    %v1087 = vpack.c.b16 %v1055, %v1054
    %1120 = vmatprep.subr.bf16.mxu0 0
    %1121 = vmatpush1.bf16.msra.mxu0 %v1056
    %1122 = vmatprep.subr.bf16.mxu0 0
    %1123 = vmatpush1.bf16.msra.mxu0 %v1057
    %1124 = vmatprep.subr.bf16.mxu0 0
    %1125 = vmatpush1.bf16.msra.mxu0 %v1058
    %1126 = vmatprep.subr.bf16.mxu0 0
    %1127 = vmatpush1.bf16.msra.mxu0 %v1059
    %1128 = vmatprep.subr.bf16.mxu0 0
    %1129 = vmatpush1.bf16.msra.mxu0 %v1060
    %1130 = vmatprep.subr.bf16.mxu0 0
    %1131 = vmatpush1.bf16.msra.mxu0 %v1061
    %1132 = vmatprep.subr.bf16.mxu0 0
    %1133 = vmatpush1.bf16.msra.mxu0 %v1062
    %1134 = vmatprep.subr.bf16.mxu0 0
    %1135 = vmatpush1.bf16.msra.mxu0 %v1063
    %1136 = vmatprep.subr.bf16.mxu0 0
    %1137 = vmatpush1.bf16.msra.mxu0 %v1064
    %1138 = vmatprep.subr.bf16.mxu0 0
    %1139 = vmatpush1.bf16.msra.mxu0 %v1065
    %1140 = vmatprep.subr.bf16.mxu0 0
    %1141 = vmatpush1.bf16.msra.mxu0 %v1066
    %1142 = vmatprep.subr.bf16.mxu0 0
    %1143 = vmatpush1.bf16.msra.mxu0 %v1067
    %1144 = vmatprep.subr.bf16.mxu0 0
    %1145 = vmatpush1.bf16.msra.mxu0 %v1068
    %1146 = vmatprep.subr.bf16.mxu0 0
    %1147 = vmatpush1.bf16.msra.mxu0 %v1069
    %1148 = vmatprep.subr.bf16.mxu0 0
    %1149 = vmatpush1.bf16.msra.mxu0 %v1070
    %1150 = vmatprep.subr.bf16.mxu0 0
    %1151 = vmatpush1.bf16.msra.mxu0 %v1071
    %1152 = vmatprep.mubr.bf16.mxu0 %v854
    %1153 = vmatmul.mubr.bf16.gmra.mrb[0].mxu0 %v853
    %v1154 = vpop.f32.mrb[0].mxu0
    %v1155 = vadd.f32 %v926, %v1154
    %v1156 = vpop.f32.mrb[0].mxu0
    %v1157 = vpop.f32.mrb[0].mxu0
    %v1158 = vpop.f32.mrb[0].mxu0
    %1159 = vdwg.mxu0
    %1160 = vmatprep.subr.bf16.mxu0 0
    %1161 = vmatpush1.bf16.msra.mxu0 %v1072
    %1162 = vmatprep.subr.bf16.mxu0 0
    %1163 = vmatpush1.bf16.msra.mxu0 %v1073
    %1164 = vmatprep.subr.bf16.mxu0 0
    %1165 = vmatpush1.bf16.msra.mxu0 %v1074
    %1166 = vmatprep.subr.bf16.mxu0 0
    %1167 = vmatpush1.bf16.msra.mxu0 %v1075
    %1168 = vmatprep.subr.bf16.mxu0 0
    %1169 = vmatpush1.bf16.msra.mxu0 %v1076
    %1170 = vmatprep.subr.bf16.mxu0 0
    %1171 = vmatpush1.bf16.msra.mxu0 %v1077
    %1172 = vmatprep.subr.bf16.mxu0 0
    %1173 = vmatpush1.bf16.msra.mxu0 %v1078
    %1174 = vmatprep.subr.bf16.mxu0 0
    %1175 = vmatpush1.bf16.msra.mxu0 %v1079
    %1176 = vmatprep.subr.bf16.mxu0 0
    %1177 = vmatpush1.bf16.msra.mxu0 %v1080
    %1178 = vmatprep.subr.bf16.mxu0 0
    %1179 = vmatpush1.bf16.msra.mxu0 %v1081
    %1180 = vmatprep.subr.bf16.mxu0 0
    %1181 = vmatpush1.bf16.msra.mxu0 %v1082
    %1182 = vmatprep.subr.bf16.mxu0 0
    %1183 = vmatpush1.bf16.msra.mxu0 %v1083
    %1184 = vmatprep.subr.bf16.mxu0 0
    %1185 = vmatpush1.bf16.msra.mxu0 %v1084
    %1186 = vmatprep.subr.bf16.mxu0 0
    %1187 = vmatpush1.bf16.msra.mxu0 %v1085
    %1188 = vmatprep.subr.bf16.mxu0 0
    %1189 = vmatpush1.bf16.msra.mxu0 %v1086
    %1190 = vmatprep.subr.bf16.mxu0 0
    %1191 = vmatpush1.bf16.msra.mxu0 %v1087
    %1192 = vmatprep.mubr.bf16.mxu0 %v856
    %1193 = vmatmul.mubr.bf16.gmra.mrb[0].mxu0 %v855
    %v1194 = vpop.f32.mrb[0].mxu0
    %v1195 = vadd.f32 %v1155, %v1194
    %v1196 = vpop.f32.mrb[0].mxu0
    %v1197 = vpop.f32.mrb[0].mxu0
    %v1198 = vpop.f32.mrb[0].mxu0
    %1199 = vdwg.mxu0
    %v1200 = vsub.f32 0.0, %v1195
    %v1201 = vmul.f32 %v1200, 1.442695
    %v1202 = vpow.pop %v1201
    %v1203 = vadd.f32 %v1202, 1.0
    %v1204 = vrcp.pop %v1203
    %1205 = vst [vmem:[%s11] sm:$0xff] %v1204
    // Predicated region
    $region58: #{_lambda_.1} parent=1 // pred_check
      _
    $region59: #{_lambda_.1} parent=1 // pred_check_branch
      %1207 = sbr.rel (0) target = $region61
    $region60: #{_lambda_.1} parent=1 // pred_region
      _
    $region61: #{_lambda_.1} parent=1 // pred_fallthru
      _
    // Predicated region
    $region62: #{_lambda_.1} parent=1 // pred_check
      _
    $region63: #{_lambda_.1} parent=1 // pred_check_branch
      %1209 = sbr.rel (0) target = $region65
    $region64: #{_lambda_.1} parent=1 // pred_region
      _
    $region65: #{_lambda_.1} parent=1 // pred_fallthru
      _
    %1210 = vsyncpa [#allocation3], 1
    %1211 = vsyncpa [#allocation5], 1

</llo_original>
